<compile_context>
chip_gen: v7x
topology: tpu7x:2x2x1
jax: 0.10.0
libtpu: 0.0.40
codegen_flags: <defaults>
</compile_context>

<pallas_src>
import numpy as np
import jax
import jax.numpy as jnp
from jax import lax
from jax.experimental import pallas as pl
from jax.experimental.pallas import tpu as pltpu

EPS = 1e-3
K1D = np.array([0.05, 0.25, 0.4, 0.25, 0.05], dtype=np.float64)
K2D = np.outer(K1D, K1D).astype(np.float32)  # 5x5 Gaussian (= k.T @ k)


def _round_up(n: int, m: int) -> int:
    return ((n + m - 1) // m) * m


def _blur_matrix(n: int) -> np.ndarray:
    """A[i, j] = sum of 1-D taps t with clamp(i + t - 2, 0, n-1) == j.

    Applying A along an axis == 1-D Gaussian filter with replicate padding.
    """
    A = np.zeros((n, n), dtype=np.float64)
    for i in range(n):
        for t in range(5):
            j = min(max(i + t - 2, 0), n - 1)
            A[i, j] += K1D[t]
    return A


def _fold_matrices(H: int, W: int, Hp: int, Wp: int):
    """Fold blur + even-mask*4 + blur into one matrix per side (zero-padded)."""
    a_h = _blur_matrix(H)
    a_w = _blur_matrix(W)
    d_h = np.diag(2.0 * (np.arange(H) % 2 == 0))
    d_w = np.diag(2.0 * (np.arange(W) % 2 == 0))
    m_h = a_h @ d_h @ a_h          # (H, H)
    m_w_t = a_w.T @ d_w @ a_w.T    # (W, W) -- already the right-multiplier
    m_h_p = np.zeros((Hp, Hp), np.float64)
    m_h_p[:H, :H] = m_h
    m_w_t_p = np.zeros((Wp, Wp), np.float64)
    m_w_t_p[:W, :W] = m_w_t
    return m_h_p, m_w_t_p


def _vmem_capacity_bytes() -> int:
    """Physical VMEM per TensorCore; conservative default if unqueryable."""
    try:
        info = pltpu.get_tpu_info()
        cap = getattr(info, "vmem_capacity_bytes", None)
        if cap:
            return int(cap)
    except Exception:
        pass
    return 64 * 2**20   # assume v7x-sized VMEM if unknown (most restrictive)


def _pick_bn(n, hp, wp, msize, vmem_cap, *, max_bn=16, nbuf_xy=2):
    """Images per grid step, sized against a generation-aware VMEM budget."""
    budget = (24 if vmem_cap >= 96 * 2**20 else 14) * 2**20
    fixed = (hp * hp + wp * wp) * msize + 4 * hp * wp * 4 + 4 * wp * 4
    per_img = (2 * nbuf_xy * hp * wp * 4      # x & y pipeline buffers (f32)
               + hp * wp * msize              # flattened d0 in matmul dtype
               + hp * wp * 4)                 # u scratch (f32)
    if fixed >= budget:
        cap = 1
    else:
        cap = max(1, (budget - fixed) // per_img)
    bn = int(min(cap, max_bn, max(n, 1)))
    if n >= 2:
        # Keep G = ceil(N/bn) >= 2 so megacore (v7x: 2 TCs) always has work.
        bn = min(bn, (n + 1) // 2)
    return max(1, bn)


def _edge_loss_kernel(x_ref, y_ref, mh_ref, mwt_ref, out_ref, u_ref):
    """bn images per grid step; writes a (1, Wp) partial-sum row per step."""
    md = mh_ref.dtype                      # matmul operand dtype (bf16 or f32)
    bn, hp, wp = x_ref.shape
    mh = mh_ref[...]                       # (Hp, Hp)
    mwt = mwt_ref[...]                     # (Wp, Wp)  == folded A_W.T D_W A_W.T
    eps2 = jnp.float32(EPS * EPS)

    # Batched W-side contraction: ONE (bn*Hp, Wp) @ (Wp, Wp) MXU matmul.
    d0m = (x_ref[...] - y_ref[...]).astype(md).reshape(bn * hp, wp)
    u_ref[...] = jnp.dot(
        d0m, mwt, preferred_element_type=jnp.float32).reshape(bn, hp, wp)

    def body(b, partial):
        # H-side contraction per image with stationary M_H.
        s = jnp.dot(mh, u_ref[b].astype(md),
                    preferred_element_type=jnp.float32)          # (Hp, Wp)
        lap = (x_ref[b] - y_ref[b]) - s                           # lap(x-y), f32
        charb = jnp.sqrt(lap * lap + eps2)   # padded region contributes EPS
        return partial + jnp.sum(charb, axis=0, keepdims=True)

    out_ref[...] = lax.fori_loop(0, bn, body,
                                 jnp.zeros((1, wp), jnp.float32))


def edge_loss(x, y, *, matmul_dtype=jnp.bfloat16):
    """Pallas EdgeLoss.forward. x, y: (N, 1, H, W) float32 -> scalar."""
    assert x.shape == y.shape
    N, C, H, W = x.shape
    assert C == 1, "EdgeLoss's conv weight is (1,1,5,5): single-channel only"

    Hp = _round_up(H, 16)     # sublane / bf16-packing aligned
    Wp = _round_up(W, 128)    # lane aligned
    msize = jnp.dtype(matmul_dtype).itemsize

    vmem_cap = _vmem_capacity_bytes()
    big_vmem = vmem_cap >= 96 * 2**20                 # v5e/v6e (128 MiB)
    deep_pipe = big_vmem and (Hp * Wp * 4) <= (2 * 2**20)
    nbuf_xy = 3 if deep_pipe else 2

    bn = _pick_bn(N, Hp, Wp, msize, vmem_cap, nbuf_xy=nbuf_xy)
    N_pad = _round_up(N, bn)
    G = N_pad // bn
    if nbuf_xy == 3 and G < 3:
        nbuf_xy = 2                                   # no point in 3 buffers

    # Zero-fill pads (batch + spatial). No-op (and elided by XLA) when already
    # aligned / divisible.
    x3 = x.reshape(N, H, W).astype(jnp.float32)
    y3 = y.reshape(N, H, W).astype(jnp.float32)
    pads = ((0, N_pad - N), (0, Hp - H), (0, Wp - W))
    if any(p[1] for p in pads):
        # TODO(synk): fuse this pad into the pallas_call inputs
        # (allow_input_fusion) to avoid an extra HBM round trip when unaligned.
        x3 = jnp.pad(x3, pads)
        y3 = jnp.pad(y3, pads)

    m_h_np, m_wt_np = _fold_matrices(H, W, Hp, Wp)
    # The analytic pad correction below relies on zero-padded inputs AND
    # exactly-zero padded rows/cols of the folded matrices.
    assert not m_h_np[H:, :].any() and not m_h_np[:, H:].any()
    assert not m_wt_np[W:, :].any() and not m_wt_np[:, W:].any()
    m_h = jnp.asarray(m_h_np.astype(np.float32)).astype(matmul_dtype)
    m_wt = jnp.asarray(m_wt_np.astype(np.float32)).astype(matmul_dtype)

    # VMEM working-set estimate (conservative: matrices counted double-buffered
    # so the no-pipeline_mode fallback still fits).
    est = (2 * nbuf_xy * bn * Hp * Wp * 4          # x & y pipeline buffers
           + bn * Hp * Wp * msize                   # flattened d0 temp
           + bn * Hp * Wp * 4                       # u scratch (f32)
           + 2 * (Hp * Hp + Wp * Wp) * msize        # folded matrices
           + 4 * Hp * Wp * 4                        # per-image f32 temporaries
           + 2 * 2 * Wp * 4)                        # output rows
    hard_cap = max(vmem_cap - 16 * 2**20, 16 * 2**20)   # leave scratch margin
    vmem_limit = int(min(max(int(1.5 * est), 16 * 2**20), hard_cap))

    def run(use_pipeline_mode):
        def xy_spec():
            if use_pipeline_mode and nbuf_xy != 2:
                return pl.BlockSpec((bn, Hp, Wp), lambda i: (i, 0, 0),
                                    pipeline_mode=pl.Buffered(nbuf_xy))
            return pl.BlockSpec((bn, Hp, Wp), lambda i: (i, 0, 0))

        def inv_spec(n):
            if use_pipeline_mode:
                # Grid-invariant operand: single buffer (halves its footprint).
                return pl.BlockSpec((n, n), lambda i: (0, 0),
                                    pipeline_mode=pl.Buffered(1))
            return pl.BlockSpec((n, n), lambda i: (0, 0))

        return pl.pallas_call(
            _edge_loss_kernel,
            out_shape=jax.ShapeDtypeStruct((G, 1, Wp), jnp.float32),
            grid_spec=pltpu.PrefetchScalarGridSpec(
                num_scalar_prefetch=0,
                grid=(G,),
                in_specs=[xy_spec(),            # x block
                          xy_spec(),            # y block
                          inv_spec(Hp),         # M_H
                          inv_spec(Wp)],        # M_W.T
                out_specs=pl.BlockSpec((None, 1, Wp), lambda i: (i, 0, 0)),
                scratch_shapes=[pltpu.VMEM((bn, Hp, Wp), jnp.float32)]),
            compiler_params=pltpu.CompilerParams(
                dimension_semantics=("parallel",),
                vmem_limit_bytes=vmem_limit),
        )(x3, y3, m_h, m_wt)

    try:
        out = run(True)
    except Exception:
        # Fallback without pipeline_mode for Pallas versions that reject it.
        out = run(False)

    # Unmasked sum: every zero-padded element (spatial pad + zero batch-pad
    # images) contributes exactly EPS.  Subtract analytically, then mean over
    # the real N*C*H*W elements (matches torch.mean).
    pad_correction = (float(N_pad) * Hp * Wp - float(N) * H * W) * EPS
    denom = float(N * C * H * W)
    return (jnp.sum(out) - jnp.float32(pad_correction)) * jnp.float32(1.0 / denom)


# ---------------- pure-numpy reference (mirrors the PyTorch code) ------------
def _np_conv_gauss(img):
    H, W = img.shape
    p = np.pad(img, 2, mode="edge")
    out = np.zeros((H, W), np.float32)
    for di in range(5):
        for dj in range(5):
            out += K2D[di, dj] * p[di:di + H, dj:dj + W]
    return out


def _np_laplacian(img):
    f = _np_conv_gauss(img)
    nf = np.zeros_like(f)
    nf[::2, ::2] = f[::2, ::2] * 4.0
    f2 = _np_conv_gauss(nf)
    return img - f2


def _np_edge_loss(x, y):
    diffs = []
    for n in range(x.shape[0]):
        diffs.append(_np_laplacian(x[n, 0]) - _np_laplacian(y[n, 0]))
    d = np.stack(diffs)
    return float(np.mean(np.sqrt(d * d + EPS * EPS)))


if __name__ == "__main__":
    key = jax.random.PRNGKey(0)
    kx, ky, kx2, ky2 = jax.random.split(key, 4)

    # --- test 1: aligned-ish small shape (N=2, 16x16) -----------------------
    N, C, H, W = 2, 1, 16, 16
    x = jax.random.uniform(kx, (N, C, H, W), dtype=jnp.float32)
    y = jax.random.uniform(ky, (N, C, H, W), dtype=jnp.float32)
    ref = _np_edge_loss(np.asarray(x), np.asarray(y))

    loss_f32 = jax.block_until_ready(edge_loss(x, y, matmul_dtype=jnp.float32))
    np.testing.assert_allclose(float(loss_f32), ref, rtol=1e-4, atol=1e-5)

    loss_bf16 = jax.block_until_ready(edge_loss(x, y, matmul_dtype=jnp.bfloat16))
    np.testing.assert_allclose(float(loss_bf16), ref, rtol=2e-2, atol=1e-3)

    # --- test 2: non-divisor batch + unaligned H/W (exercises pad paths) ----
    N2, H2, W2 = 3, 20, 40
    x2 = jax.random.uniform(kx2, (N2, 1, H2, W2), dtype=jnp.float32)
    y2 = jax.random.uniform(ky2, (N2, 1, H2, W2), dtype=jnp.float32)
    ref2 = _np_edge_loss(np.asarray(x2), np.asarray(y2))

    loss2 = jax.block_until_ready(edge_loss(x2, y2, matmul_dtype=jnp.float32))
    np.testing.assert_allclose(float(loss2), ref2, rtol=1e-4, atol=1e-5)

    print("KERNEL_OK")
</pallas_src>

<mosaic_0001>
module attributes {stable_mosaic.version = 11 : i64} {
  func.func @_edge_loss_kernel(%arg0: i32, %arg1: memref<1x16x128xf32, #tpu.memory_space<vmem>>, %arg2: memref<1x16x128xf32, #tpu.memory_space<vmem>>, %arg3: memref<16x16xf32, #tpu.memory_space<vmem>>, %arg4: memref<128x128xf32, #tpu.memory_space<vmem>>, %arg5: memref<1x1x128xf32, #tpu.memory_space<vmem>>, %arg6: memref<1x16x128xf32, #tpu.memory_space<vmem>>) attributes {dimension_semantics = [#tpu.dimension_semantics<parallel>], iteration_bounds = array<i64: 2>, scalar_prefetch = 0 : i64, scratch_operands = 1 : i64, tpu.core_type = #tpu.core_type<tc>, window_params = [{transform_indices = @transform_0, window_bounds = array<i64: 1, 16, 128>}, {transform_indices = @transform_1, window_bounds = array<i64: 1, 16, 128>}, {pipeline_mode = #tpu.pipeline_mode<synchronous>, transform_indices = @transform_2, window_bounds = array<i64: 16, 16>}, {pipeline_mode = #tpu.pipeline_mode<synchronous>, transform_indices = @transform_3, window_bounds = array<i64: 128, 128>}, {transform_indices = @transform_4, window_bounds = array<i64: 1, 1, 128>}]} {
    %c0 = arith.constant 0 : index
    %c0_0 = arith.constant 0 : index
    %0 = vector.load %arg3[%c0, %c0_0] : memref<16x16xf32, #tpu.memory_space<vmem>>, vector<16x16xf32>
    %c0_1 = arith.constant 0 : index
    %c0_2 = arith.constant 0 : index
    %1 = vector.load %arg4[%c0_1, %c0_2] : memref<128x128xf32, #tpu.memory_space<vmem>>, vector<128x128xf32>
    %c0_3 = arith.constant 0 : index
    %c0_4 = arith.constant 0 : index
    %c0_5 = arith.constant 0 : index
    %2 = vector.load %arg1[%c0_3, %c0_4, %c0_5] : memref<1x16x128xf32, #tpu.memory_space<vmem>>, vector<1x16x128xf32>
    %c0_6 = arith.constant 0 : index
    %c0_7 = arith.constant 0 : index
    %c0_8 = arith.constant 0 : index
    %3 = vector.load %arg2[%c0_6, %c0_7, %c0_8] : memref<1x16x128xf32, #tpu.memory_space<vmem>>, vector<1x16x128xf32>
    %4 = arith.subf %2, %3 : vector<1x16x128xf32>
    %5 = vector.shape_cast %4 : vector<1x16x128xf32> to vector<16x128xf32>
    %cst = arith.constant dense<0.000000e+00> : vector<16x128xf32>
    %6 = tpu.matmul %5, %1, %cst {dimension_numbers = #tpu.dot_dimension_numbers<[1], [0], [0], [1], [0, 0, 1, 1], [], []>} : vector<16x128xf32>, vector<128x128xf32>, vector<16x128xf32> -> vector<16x128xf32>
    %7 = vector.shape_cast %6 : vector<16x128xf32> to vector<1x16x128xf32>
    %c0_9 = arith.constant 0 : index
    %c0_10 = arith.constant 0 : index
    %c0_11 = arith.constant 0 : index
    %8 = vector.load %arg6[%c0_9, %c0_10, %c0_11] : memref<1x16x128xf32, #tpu.memory_space<vmem>>, vector<1x16x128xf32>
    tpu.vector_store %arg6[%c0_9, %c0_10, %c0_11], %7 {strides = array<i32>} : memref<1x16x128xf32, #tpu.memory_space<vmem>>, vector<1x16x128xf32>,
    %cst_12 = arith.constant 0.000000e+00 : f32
    %9 = vector.broadcast %cst_12 : f32 to vector<1x128xf32>
    %cst_13 = arith.constant 9.99999997E-7 : f32
    %c0_i32 = arith.constant 0 : i32
    %10 = arith.index_cast %c0_i32 : i32 to index
    %c0_14 = arith.constant 0 : index
    %c0_15 = arith.constant 0 : index
    %11 = vector.load %arg6[%10, %c0_14, %c0_15] : memref<1x16x128xf32, #tpu.memory_space<vmem>>, vector<1x16x128xf32>
    %12 = vector.shape_cast %11 : vector<1x16x128xf32> to vector<16x128xf32>
    %cst_16 = arith.constant dense<0.000000e+00> : vector<16x128xf32>
    %13 = tpu.matmul %0, %12, %cst_16 {dimension_numbers = #tpu.dot_dimension_numbers<[1], [0], [0], [1], [0, 0, 1, 1], [], []>} : vector<16x16xf32>, vector<16x128xf32>, vector<16x128xf32> -> vector<16x128xf32>
    %14 = arith.index_cast %c0_i32 : i32 to index
    %c0_17 = arith.constant 0 : index
    %c0_18 = arith.constant 0 : index
    %15 = vector.load %arg1[%14, %c0_17, %c0_18] : memref<1x16x128xf32, #tpu.memory_space<vmem>>, vector<1x16x128xf32>
    %16 = vector.shape_cast %15 : vector<1x16x128xf32> to vector<16x128xf32>
    %17 = arith.index_cast %c0_i32 : i32 to index
    %c0_19 = arith.constant 0 : index
    %c0_20 = arith.constant 0 : index
    %18 = vector.load %arg2[%17, %c0_19, %c0_20] : memref<1x16x128xf32, #tpu.memory_space<vmem>>, vector<1x16x128xf32>
    %19 = vector.shape_cast %18 : vector<1x16x128xf32> to vector<16x128xf32>
    %20 = arith.subf %16, %19 : vector<16x128xf32>
    %21 = arith.subf %20, %13 : vector<16x128xf32>
    %22 = arith.mulf %21, %21 : vector<16x128xf32>
    %23 = vector.broadcast %cst_13 : f32 to vector<16x128xf32>
    %24 = arith.addf %22, %23 : vector<16x128xf32>
    %25 = math.sqrt %24 : vector<16x128xf32>
    %cst_21 = arith.constant dense<0.000000e+00> : vector<128xf32>
    %26 = vector.multi_reduction <add>, %25, %cst_21 [0] : vector<16x128xf32> to vector<128xf32>
    %27 = vector.shape_cast %26 : vector<128xf32> to vector<1x128xf32>
    %28 = arith.addf %9, %27 : vector<1x128xf32>
    %c1_i32 = arith.constant 1 : i32
    %c0_22 = arith.constant 0 : index
    %c0_23 = arith.constant 0 : index
    %c0_24 = arith.constant 0 : index
    %29 = vector.load %arg5[%c0_22, %c0_23, %c0_24] : memref<1x1x128xf32, #tpu.memory_space<vmem>>, vector<1x1x128xf32>
    %30 = vector.shape_cast %29 : vector<1x1x128xf32> to vector<1x128xf32>
    %31 = vector.shape_cast %28 : vector<1x128xf32> to vector<1x1x128xf32>
    tpu.vector_store %arg5[%c0_22, %c0_23, %c0_24], %31 {strides = array<i32>} : memref<1x1x128xf32, #tpu.memory_space<vmem>>, vector<1x1x128xf32>,
    return
  }
  func.func @transform_0(%arg0: i32) -> (i32, i32, i32) {
    %c0_i32 = arith.constant 0 : i32
    %c0_i32_0 = arith.constant 0 : i32
    %c0_i32_1 = arith.constant 0 : i32
    return %arg0, %c0_i32, %c0_i32_0 : i32, i32, i32
  }
  func.func @transform_1(%arg0: i32) -> (i32, i32, i32) {
    %c0_i32 = arith.constant 0 : i32
    %c0_i32_0 = arith.constant 0 : i32
    %c0_i32_1 = arith.constant 0 : i32
    return %arg0, %c0_i32, %c0_i32_0 : i32, i32, i32
  }
  func.func @transform_2(%arg0: i32) -> (i32, i32) {
    %c0_i32 = arith.constant 0 : i32
    %c0_i32_0 = arith.constant 0 : i32
    %c0_i32_1 = arith.constant 0 : i32
    return %c0_i32, %c0_i32_0 : i32, i32
  }
  func.func @transform_3(%arg0: i32) -> (i32, i32) {
    %c0_i32 = arith.constant 0 : i32
    %c0_i32_0 = arith.constant 0 : i32
    %c0_i32_1 = arith.constant 0 : i32
    return %c0_i32, %c0_i32_0 : i32, i32
  }
  func.func @transform_4(%arg0: i32) -> (i32, i32, i32) {
    %c0_i32 = arith.constant 0 : i32
    %c0_i32_0 = arith.constant 0 : i32
    %c0_i32_1 = arith.constant 0 : i32
    return %arg0, %c0_i32, %c0_i32_0 : i32, i32, i32
  }
}

module attributes {stable_mosaic.version = 11 : i64} {
  func.func @_edge_loss_kernel(%arg0: i32, %arg1: memref<1x16x128xf32, #tpu.memory_space<vmem>>, %arg2: memref<1x16x128xf32, #tpu.memory_space<vmem>>, %arg3: memref<16x16xf32, #tpu.memory_space<vmem>>, %arg4: memref<128x128xf32, #tpu.memory_space<vmem>>, %arg5: memref<1x1x128xf32, #tpu.memory_space<vmem>>, %arg6: memref<1x16x128xf32, #tpu.memory_space<vmem>>) attributes {dimension_semantics = [#tpu.dimension_semantics<parallel>], iteration_bounds = array<i64: 2>, scalar_prefetch = 0 : i64, scratch_operands = 1 : i64, tpu.core_type = #tpu.core_type<tc>, window_params = [{transform_indices = @transform_0, window_bounds = array<i64: 1, 16, 128>}, {transform_indices = @transform_1, window_bounds = array<i64: 1, 16, 128>}, {pipeline_mode = #tpu.pipeline_mode<synchronous>, transform_indices = @transform_2, window_bounds = array<i64: 16, 16>}, {pipeline_mode = #tpu.pipeline_mode<synchronous>, transform_indices = @transform_3, window_bounds = array<i64: 128, 128>}, {transform_indices = @transform_4, window_bounds = array<i64: 1, 1, 128>}]} {
    %c0 = arith.constant 0 : index
    %c0_0 = arith.constant 0 : index
    %0 = vector.load %arg3[%c0, %c0_0] : memref<16x16xf32, #tpu.memory_space<vmem>>, vector<16x16xf32>
    %c0_1 = arith.constant 0 : index
    %c0_2 = arith.constant 0 : index
    %1 = vector.load %arg4[%c0_1, %c0_2] : memref<128x128xf32, #tpu.memory_space<vmem>>, vector<128x128xf32>
    %c0_3 = arith.constant 0 : index
    %c0_4 = arith.constant 0 : index
    %c0_5 = arith.constant 0 : index
    %2 = vector.load %arg1[%c0_3, %c0_4, %c0_5] : memref<1x16x128xf32, #tpu.memory_space<vmem>>, vector<1x16x128xf32>
    %c0_6 = arith.constant 0 : index
    %c0_7 = arith.constant 0 : index
    %c0_8 = arith.constant 0 : index
    %3 = vector.load %arg2[%c0_6, %c0_7, %c0_8] : memref<1x16x128xf32, #tpu.memory_space<vmem>>, vector<1x16x128xf32>
    %4 = arith.subf %2, %3 : vector<1x16x128xf32>
    %5 = vector.shape_cast %4 : vector<1x16x128xf32> to vector<16x128xf32>
    %cst = arith.constant dense<0.000000e+00> : vector<16x128xf32>
    %6 = tpu.matmul %5, %1, %cst {dimension_numbers = #tpu.dot_dimension_numbers<[1], [0], [0], [1], [0, 0, 1, 1], [], []>} : vector<16x128xf32>, vector<128x128xf32>, vector<16x128xf32> -> vector<16x128xf32>
    %7 = vector.shape_cast %6 : vector<16x128xf32> to vector<1x16x128xf32>
    %c0_9 = arith.constant 0 : index
    %c0_10 = arith.constant 0 : index
    %c0_11 = arith.constant 0 : index
    %8 = vector.load %arg6[%c0_9, %c0_10, %c0_11] : memref<1x16x128xf32, #tpu.memory_space<vmem>>, vector<1x16x128xf32>
    tpu.vector_store %arg6[%c0_9, %c0_10, %c0_11], %7 {strides = array<i32>} : memref<1x16x128xf32, #tpu.memory_space<vmem>>, vector<1x16x128xf32>,
    %cst_12 = arith.constant 0.000000e+00 : f32
    %9 = vector.broadcast %cst_12 : f32 to vector<1x128xf32>
    %cst_13 = arith.constant 9.99999997E-7 : f32
    %c0_i32 = arith.constant 0 : i32
    %10 = arith.index_cast %c0_i32 : i32 to index
    %c0_14 = arith.constant 0 : index
    %c0_15 = arith.constant 0 : index
    %11 = vector.load %arg6[%10, %c0_14, %c0_15] : memref<1x16x128xf32, #tpu.memory_space<vmem>>, vector<1x16x128xf32>
    %12 = vector.shape_cast %11 : vector<1x16x128xf32> to vector<16x128xf32>
    %cst_16 = arith.constant dense<0.000000e+00> : vector<16x128xf32>
    %13 = tpu.matmul %0, %12, %cst_16 {dimension_numbers = #tpu.dot_dimension_numbers<[1], [0], [0], [1], [0, 0, 1, 1], [], []>} : vector<16x16xf32>, vector<16x128xf32>, vector<16x128xf32> -> vector<16x128xf32>
    %14 = arith.index_cast %c0_i32 : i32 to index
    %c0_17 = arith.constant 0 : index
    %c0_18 = arith.constant 0 : index
    %15 = vector.load %arg1[%14, %c0_17, %c0_18] : memref<1x16x128xf32, #tpu.memory_space<vmem>>, vector<1x16x128xf32>
    %16 = vector.shape_cast %15 : vector<1x16x128xf32> to vector<16x128xf32>
    %17 = arith.index_cast %c0_i32 : i32 to index
    %c0_19 = arith.constant 0 : index
    %c0_20 = arith.constant 0 : index
    %18 = vector.load %arg2[%17, %c0_19, %c0_20] : memref<1x16x128xf32, #tpu.memory_space<vmem>>, vector<1x16x128xf32>
    %19 = vector.shape_cast %18 : vector<1x16x128xf32> to vector<16x128xf32>
    %20 = arith.subf %16, %19 : vector<16x128xf32>
    %21 = arith.subf %20, %13 : vector<16x128xf32>
    %22 = arith.mulf %21, %21 : vector<16x128xf32>
    %23 = vector.broadcast %cst_13 : f32 to vector<16x128xf32>
    %24 = arith.addf %22, %23 : vector<16x128xf32>
    %25 = math.sqrt %24 : vector<16x128xf32>
    %cst_21 = arith.constant dense<0.000000e+00> : vector<128xf32>
    %26 = vector.multi_reduction <add>, %25, %cst_21 [0] : vector<16x128xf32> to vector<128xf32>
    %27 = vector.shape_cast %26 : vector<128xf32> to vector<1x128xf32>
    %28 = arith.addf %9, %27 : vector<1x128xf32>
    %c1_i32 = arith.constant 1 : i32
    %c0_22 = arith.constant 0 : index
    %c0_23 = arith.constant 0 : index
    %c0_24 = arith.constant 0 : index
    %29 = vector.load %arg5[%c0_22, %c0_23, %c0_24] : memref<1x1x128xf32, #tpu.memory_space<vmem>>, vector<1x1x128xf32>
    %30 = vector.shape_cast %29 : vector<1x1x128xf32> to vector<1x128xf32>
    %31 = vector.shape_cast %28 : vector<1x128xf32> to vector<1x1x128xf32>
    tpu.vector_store %arg5[%c0_22, %c0_23, %c0_24], %31 {strides = array<i32>} : memref<1x1x128xf32, #tpu.memory_space<vmem>>, vector<1x1x128xf32>,
    return
  }
  func.func @transform_0(%arg0: i32) -> (i32, i32, i32) {
    %c0_i32 = arith.constant 0 : i32
    %c0_i32_0 = arith.constant 0 : i32
    %c0_i32_1 = arith.constant 0 : i32
    return %arg0, %c0_i32, %c0_i32_0 : i32, i32, i32
  }
  func.func @transform_1(%arg0: i32) -> (i32, i32, i32) {
    %c0_i32 = arith.constant 0 : i32
    %c0_i32_0 = arith.constant 0 : i32
    %c0_i32_1 = arith.constant 0 : i32
    return %arg0, %c0_i32, %c0_i32_0 : i32, i32, i32
  }
  func.func @transform_2(%arg0: i32) -> (i32, i32) {
    %c0_i32 = arith.constant 0 : i32
    %c0_i32_0 = arith.constant 0 : i32
    %c0_i32_1 = arith.constant 0 : i32
    return %c0_i32, %c0_i32_0 : i32, i32
  }
  func.func @transform_3(%arg0: i32) -> (i32, i32) {
    %c0_i32 = arith.constant 0 : i32
    %c0_i32_0 = arith.constant 0 : i32
    %c0_i32_1 = arith.constant 0 : i32
    return %c0_i32, %c0_i32_0 : i32, i32
  }
  func.func @transform_4(%arg0: i32) -> (i32, i32, i32) {
    %c0_i32 = arith.constant 0 : i32
    %c0_i32_0 = arith.constant 0 : i32
    %c0_i32_1 = arith.constant 0 : i32
    return %arg0, %c0_i32, %c0_i32_0 : i32, i32, i32
  }
}

</mosaic_0001>

<llo_original>
// kernel: tpu_custom_call.1
$region0: #{tpu_custom_call.1}
  #allocation0 [shape = 'u32[]', space=smem, size = 0x4, offset = 0x4, fixed_abs, tag = 'smem constant byte address 0x4 - core index']
  #allocation1 [shape = 'u32[144,128]{1,0:T(1,128)}', space=vmem, size = 0x12000, scoped, tag = 'internal scratch']
  #allocation2 [shape = 'f32[1,16,128]{2,1,0:T(8,128)}', space=vmem, size = 0x2000, scoped, tag = 'scratch operand']
  %s0 = inlined_call_operand.hbm [shape: f32[2,16,128], index: 0, kind: input, shape index: {}]
  %s1 = inlined_call_operand.hbm [shape: f32[2,16,128], index: 1, kind: input, shape index: {}]
  %s2 = inlined_call_operand.hbm [shape: f32[16,16], index: 2, kind: input, shape index: {}]
  %s3 = inlined_call_operand.hbm [shape: f32[128,128], index: 3, kind: input, shape index: {}]
  %s4 = inlined_call_operand.hbm [shape: f32[2,1,128], index: 4, kind: output, shape index: {}]
  %s5 = sld [smem:[#allocation0]]
  $region65: #{tpu_custom_call.1} parent=0
    _
  %s7 = ssub.s32 1, %s5
  %s8 = scalar_select 0, %s7, %s5
  $region1: #{tpu_custom_call.1} parent=0
    #allocation3 [shape = 'u8[16384]{0}', space=vmem, size = 0x4000, scoped, tag = 'input window, operand 0']
    #allocation4 [shape = 's32[2]{0}', space=sflag, size = 0x8, scoped, tag = 'scoped memory for tpu_custom_call.1']
    #allocation5 [shape = 's32[2]{0}', space=sflag, size = 0x8, scoped, tag = 'scoped memory for tpu_custom_call.1']
    #allocation6 [shape = 'u8[16384]{0}', space=vmem, size = 0x4000, scoped, tag = 'input window, operand 1']
    #allocation7 [shape = 's32[2]{0}', space=sflag, size = 0x8, scoped, tag = 'scoped memory for tpu_custom_call.1']
    #allocation8 [shape = 'u8[8192]{0}', space=vmem, size = 0x2000, scoped, tag = 'input window, operand 2, single buffered']
    #allocation9 [shape = 'u8[65536]{0}', space=vmem, size = 0x10000, scoped, tag = 'input window, operand 3, single buffered']
    #allocation10 [shape = 's32[1]{0}', space=sflag, size = 0x4, scoped, tag = 'scoped memory for tpu_custom_call.1']
    #allocation11 [shape = 'u8[1024]{0}', space=vmem, size = 0x400, scoped, tag = 'output window, operand 0']
    %9 = vsyncpa [#allocation4], 0
    %s10 = scalar_lea.sflag [#allocation4], 1
    %11 = vsyncpa %s10, 0
    %12 = vsyncpa [#allocation7], 0
    %s13 = scalar_lea.sflag [#allocation7], 1
    %14 = vsyncpa %s13, 0
    %15 = vsyncpa [#allocation10], 0
    %16 = vsyncpa [#allocation5], 0
    %s17 = scalar_lea.sflag [#allocation5], 1
    %18 = vsyncpa %s17, 0
    loop: start=0, step=1, limit=4
    $region2: #{tpu_custom_call.1} parent=1 // loop_pre_header
      _
    $region3: #{tpu_custom_call.1} parent=1 // loop_header
      %s20 = sphi 0, %s24
      %p21 = scmp.ge.s32.totalorder %s20, 4
      %s30 = sphi 0, %s32
      %s33 = sphi 0, %s30
      %s34 = sphi 0, %s33
      %s50 = sphi 0, %s34
      %s56 = sphi 0, %s58
      %s59 = sphi 0, %s56
      %s60 = sphi 0, %s59
      %s76 = sphi 0, %s60
      %s80 = sphi 0, %s80
      %s82 = sphi 0, %s80
      %s83 = sphi 0, %s82
      %s97 = sphi 0, %s83
      %s101 = sphi 0, %s101
      %s103 = sphi 0, %s101
      %s104 = sphi 0, %s103
      %s118 = sphi 0, %s104
      %s124 = sphi 0, %s126
      %s127 = sphi 0, %s124
      %s128 = sphi 0, %s127
      %s144 = sphi 0, %s128
    $region4: #{tpu_custom_call.1} parent=1 // loop_header_branch
      %23 = sbr.rel (%p21) target = $region8
    $region5: #{tpu_custom_call.1} parent=1 // loop_body
      %s25 = ssub.s32 %s20, 1
      %s26 = ssub.s32 %s20, 2
      %s27 = sadd.s32 %s20, 1
      %s28 = ssub.s32 %s20, %s27
      %p29 = scmp.eq.s32.totalorder %s28, 0
      %s31 = sadd.s32 %s30, 1
      %s32 = scalar_select %p29, %s30, %s31
      %p35 = pneg %p29
      %p36 = scmp.eq.s32.totalorder %s20, 1
      %p37 = por %p35, %p36
      %p38 = scmp.ne.s32.totalorder %s30, %s33
      %p39 = scmp.eq.s32.totalorder %s20, 0
      %p40 = por %p38, %p39
      %p41 = scmp.ne.s32.totalorder %s30, %s33
      %p42 = scmp.eq.s32.totalorder %s25, 1
      %p43 = por %p41, %p42
      %p44 = scmp.ne.s32.totalorder %s33, %s34
      %p45 = scmp.eq.s32.totalorder %s25, 0
      %p46 = por %p44, %p45
      %p47 = scmp.ne.s32.totalorder %s33, %s34
      %p48 = scmp.eq.s32.totalorder %s26, 1
      %p49 = por %p47, %p48
      %p51 = scmp.ne.s32.totalorder %s34, %s50
      %p52 = scmp.eq.s32.totalorder %s26, 0
      %p53 = por %p51, %p52
      %s54 = ssub.s32 %s20, %s27
      %p55 = scmp.eq.s32.totalorder %s54, 0
      %s57 = sadd.s32 %s56, 1
      %s58 = scalar_select %p55, %s56, %s57
      %p61 = pneg %p55
      %p62 = scmp.eq.s32.totalorder %s20, 1
      %p63 = por %p61, %p62
      %p64 = scmp.ne.s32.totalorder %s56, %s59
      %p65 = scmp.eq.s32.totalorder %s20, 0
      %p66 = por %p64, %p65
      %p67 = scmp.ne.s32.totalorder %s56, %s59
      %p68 = scmp.eq.s32.totalorder %s25, 1
      %p69 = por %p67, %p68
      %p70 = scmp.ne.s32.totalorder %s59, %s60
      %p71 = scmp.eq.s32.totalorder %s25, 0
      %p72 = por %p70, %p71
      %p73 = scmp.ne.s32.totalorder %s59, %s60
      %p74 = scmp.eq.s32.totalorder %s26, 1
      %p75 = por %p73, %p74
      %p77 = scmp.ne.s32.totalorder %s60, %s76
      %p78 = scmp.eq.s32.totalorder %s26, 0
      %p79 = por %p77, %p78
      %s81 = sadd.s32 %s80, 1
      %p84 = scmp.eq.s32.totalorder %s20, 1
      %p85 = scmp.ne.s32.totalorder %s80, %s82
      %p86 = scmp.eq.s32.totalorder %s20, 0
      %p87 = por %p85, %p86
      %p88 = scmp.ne.s32.totalorder %s80, %s82
      %p89 = scmp.eq.s32.totalorder %s25, 1
      %p90 = por %p88, %p89
      %p91 = scmp.ne.s32.totalorder %s82, %s83
      %p92 = scmp.eq.s32.totalorder %s25, 0
      %p93 = por %p91, %p92
      %p94 = scmp.ne.s32.totalorder %s82, %s83
      %p95 = scmp.eq.s32.totalorder %s26, 1
      %p96 = por %p94, %p95
      %p98 = scmp.ne.s32.totalorder %s83, %s97
      %p99 = scmp.eq.s32.totalorder %s26, 0
      %p100 = por %p98, %p99
      %s102 = sadd.s32 %s101, 1
      %p105 = scmp.eq.s32.totalorder %s20, 1
      %p106 = scmp.ne.s32.totalorder %s101, %s103
      %p107 = scmp.eq.s32.totalorder %s20, 0
      %p108 = por %p106, %p107
      %p109 = scmp.ne.s32.totalorder %s101, %s103
      %p110 = scmp.eq.s32.totalorder %s25, 1
      %p111 = por %p109, %p110
      %p112 = scmp.ne.s32.totalorder %s103, %s104
      %p113 = scmp.eq.s32.totalorder %s25, 0
      %p114 = por %p112, %p113
      %p115 = scmp.ne.s32.totalorder %s103, %s104
      %p116 = scmp.eq.s32.totalorder %s26, 1
      %p117 = por %p115, %p116
      %p119 = scmp.ne.s32.totalorder %s104, %s118
      %p120 = scmp.eq.s32.totalorder %s26, 0
      %p121 = por %p119, %p120
      %s122 = ssub.s32 %s20, %s27
      %p123 = scmp.eq.s32.totalorder %s122, 0
      %s125 = sadd.s32 %s124, 1
      %s126 = scalar_select %p123, %s124, %s125
      %p129 = pneg %p123
      %p130 = scmp.eq.s32.totalorder %s20, 1
      %p131 = por %p129, %p130
      %p132 = scmp.ne.s32.totalorder %s124, %s127
      %p133 = scmp.eq.s32.totalorder %s20, 0
      %p134 = por %p132, %p133
      %p135 = scmp.ne.s32.totalorder %s124, %s127
      %p136 = scmp.eq.s32.totalorder %s25, 1
      %p137 = por %p135, %p136
      %p138 = scmp.ne.s32.totalorder %s127, %s128
      %p139 = scmp.eq.s32.totalorder %s25, 0
      %p140 = por %p138, %p139
      %p141 = scmp.ne.s32.totalorder %s127, %s128
      %p142 = scmp.eq.s32.totalorder %s26, 1
      %p143 = por %p141, %p142
      %p145 = scmp.ne.s32.totalorder %s128, %s144
      %p146 = scmp.eq.s32.totalorder %s26, 0
      %p147 = por %p145, %p146
      %p148 = scmp.le.s32.totalorder 1, %s20
      %p149 = scmp.lt.s32.totalorder %s20, 3
      %p150 = pnand %p148, %p149
      %p151 = pneg %p150
      // Predicated region
      $region9: #{tpu_custom_call.1} parent=5 // pred_check
        _
      $region10: #{tpu_custom_call.1} parent=5 // pred_check_branch
        %153 = sbr.rel (%p150) target = $region12
      $region11: #{tpu_custom_call.1} parent=5 // pred_region
        %s154 = ssub.s32 %s20, 1
        // Predicated region
        $region13: #{tpu_custom_call.1} parent=11 // pred_check
          %p155 = pneg %p93
        $region14: #{tpu_custom_call.1} parent=11 // pred_check_branch
          %157 = sbr.rel (%p155) target = $region16
        $region15: #{tpu_custom_call.1} parent=11 // pred_region
          %s159 = ssub.s32 256, 256
          %160 = vsyncadd [#allocation7], %s159
          %s161 = sshll.u32 [#allocation8], 4
          %s162 = int_to_ptr.vmem [resolvable:$true] %s161
          %167 = dma.hbm_to_vmem [thread:$0]  %s2, 256, %s162, [#allocation7], 128, 128, 8
        $region16: #{tpu_custom_call.1} parent=11 // pred_fallthru
          _
        // Predicated region
        $region17: #{tpu_custom_call.1} parent=11 // pred_check
          %p168 = pneg %p114
        $region18: #{tpu_custom_call.1} parent=11 // pred_check_branch
          %170 = sbr.rel (%p168) target = $region20
        $region19: #{tpu_custom_call.1} parent=11 // pred_region
          %s172 = ssub.s32 2048, 2048
          %173 = vsyncadd [#allocation10], %s172
          %s174 = sshll.u32 [#allocation9], 4
          %s175 = int_to_ptr.vmem [resolvable:$true] %s174
          %180 = dma.hbm_to_vmem [thread:$0]  %s3, 2048, %s175, [#allocation10], 128, 128, 8
        $region20: #{tpu_custom_call.1} parent=11 // pred_fallthru
          _
      $region12: #{tpu_custom_call.1} parent=5 // pred_fallthru
        _
      %p181 = scmp.lt.s32.totalorder %s20, 2
      // Predicated region
      $region21: #{tpu_custom_call.1} parent=5 // pred_check
        %p182 = pneg %p181
      $region22: #{tpu_custom_call.1} parent=5 // pred_check_branch
        %184 = sbr.rel (%p182) target = $region24
      $region23: #{tpu_custom_call.1} parent=5 // pred_region
        // Predicated region
        $region25: #{tpu_custom_call.1} parent=23 // pred_check
          %p185 = pneg %p40
        $region26: #{tpu_custom_call.1} parent=23 // pred_check_branch
          %187 = sbr.rel (%p185) target = $region28
        $region27: #{tpu_custom_call.1} parent=23 // pred_region
          %s188 = sand.u32 %s30, 1
          %s189 = scalar_lea.sflag [#allocation4], %s188
          %s190 = sand.u32 %s30, 1
          %s191 = smul.addr %s190, 16
          %s192 = scalar_lea.vmem [#allocation3], %s191
          %s194 = ssub.s32 256, 256
          %195 = vsyncadd %s189, %s194
          %s196 = smul.addr %s20, 2
          %s197 = smul.addr %s196, 128
          %s198 = scalar_lea.hbm %s0, %s197
          %s199 = sshll.u32 %s192, 4
          %s200 = int_to_ptr.vmem [resolvable:$true] %s199
          %205 = dma.hbm_to_vmem [thread:$0]  %s198, 256, %s200, %s189, 128, 128, 8
        $region28: #{tpu_custom_call.1} parent=23 // pred_fallthru
          _
        // Predicated region
        $region29: #{tpu_custom_call.1} parent=23 // pred_check
          %p206 = pneg %p66
        $region30: #{tpu_custom_call.1} parent=23 // pred_check_branch
          %208 = sbr.rel (%p206) target = $region32
        $region31: #{tpu_custom_call.1} parent=23 // pred_region
          %s209 = sand.u32 %s20, 1
          %s210 = scalar_lea.sflag [#allocation7], %s209
          %s211 = sand.u32 %s56, 1
          %s212 = smul.addr %s211, 16
          %s213 = scalar_lea.vmem [#allocation6], %s212
          %s215 = ssub.s32 256, 256
          %216 = vsyncadd %s210, %s215
          %s217 = smul.addr %s20, 2
          %s218 = smul.addr %s217, 128
          %s219 = scalar_lea.hbm %s1, %s218
          %s220 = sshll.u32 %s213, 4
          %s221 = int_to_ptr.vmem [resolvable:$true] %s220
          %226 = dma.hbm_to_vmem [thread:$0]  %s219, 256, %s221, %s210, 128, 128, 8
        $region32: #{tpu_custom_call.1} parent=23 // pred_fallthru
          _
      $region24: #{tpu_custom_call.1} parent=5 // pred_fallthru
        _
      %p227 = scmp.le.s32.totalorder 1, %s20
      %p228 = scmp.lt.s32.totalorder %s20, 3
      %p229 = pnand %p227, %p228
      %p230 = pneg %p229
      // Predicated region
      $region33: #{tpu_custom_call.1} parent=5 // pred_check
        _
      $region34: #{tpu_custom_call.1} parent=5 // pred_check_branch
        %232 = sbr.rel (%p229) target = $region36
      $region35: #{tpu_custom_call.1} parent=5 // pred_region
        %s233 = ssub.s32 %s20, 1
        %s234 = sand.u32 %s33, 1
        %s235 = scalar_lea.sflag [#allocation4], %s234
        %s236 = sand.u32 %s33, 1
        %s237 = smul.addr %s236, 16
        %s238 = scalar_lea.vmem [#allocation3], %s237
        // Predicated region
        $region37: #{tpu_custom_call.1} parent=35 // pred_check
          %p239 = pneg %p46
        $region38: #{tpu_custom_call.1} parent=35 // pred_check_branch
          %241 = sbr.rel (%p239) target = $region40
        $region39: #{tpu_custom_call.1} parent=35 // pred_region
          %242 = dma.done %s235, 256
        $region40: #{tpu_custom_call.1} parent=35 // pred_fallthru
          _
        %s243 = sand.u32 %s25, 1
        %s244 = scalar_lea.sflag [#allocation7], %s243
        %s245 = sand.u32 %s59, 1
        %s246 = smul.addr %s245, 16
        %s247 = scalar_lea.vmem [#allocation6], %s246
        // Predicated region
        $region41: #{tpu_custom_call.1} parent=35 // pred_check
          %p248 = pneg %p72
        $region42: #{tpu_custom_call.1} parent=35 // pred_check_branch
          %250 = sbr.rel (%p248) target = $region44
        $region43: #{tpu_custom_call.1} parent=35 // pred_region
          %251 = dma.done %s244, 256
        $region44: #{tpu_custom_call.1} parent=35 // pred_fallthru
          _
        // Predicated region
        $region45: #{tpu_custom_call.1} parent=35 // pred_check
          %p252 = pneg %p93
        $region46: #{tpu_custom_call.1} parent=35 // pred_check_branch
          %254 = sbr.rel (%p252) target = $region48
        $region47: #{tpu_custom_call.1} parent=35 // pred_region
          %255 = dma.done [#allocation7], 256
        $region48: #{tpu_custom_call.1} parent=35 // pred_fallthru
          _
        // Predicated region
        $region49: #{tpu_custom_call.1} parent=35 // pred_check
          %p256 = pneg %p114
        $region50: #{tpu_custom_call.1} parent=35 // pred_check_branch
          %258 = sbr.rel (%p256) target = $region52
        $region51: #{tpu_custom_call.1} parent=35 // pred_region
          %259 = dma.done [#allocation10], 2048
        $region52: #{tpu_custom_call.1} parent=35 // pred_fallthru
          _
        %s260 = sand.u32 %s33, 1
        %s261 = scalar_lea.sflag [#allocation4], %s260
        %s262 = sand.u32 %s33, 1
        %s263 = smul.addr %s262, 16
        %s264 = scalar_lea.vmem [#allocation3], %s263
        %p265 = pneg %p46
        %p266 = pneg %p43
        %s267 = sand.u32 %s25, 1
        %s268 = scalar_lea.sflag [#allocation7], %s267
        %s269 = sand.u32 %s59, 1
        %s270 = smul.addr %s269, 16
        %s271 = scalar_lea.vmem [#allocation6], %s270
        %p272 = pneg %p72
        %p273 = pneg %p69
        %p274 = pneg %p93
        %p275 = pneg %p90
        %p276 = pneg %p114
        %p277 = pneg %p111
        %p278 = pneg %p140
        %p279 = pneg %p137
        %s280 = sand.u32 %s127, 1
        %s281 = scalar_lea.sflag [#allocation5], %s280
        %s282 = sand.u32 %s127, 1
        %s283 = scalar_lea.vmem [#allocation11], %s282
        %v284 = vld [vmem:[#allocation8] sm:$0xff]
        %v285 = vld [vmem:[#allocation8 + $0x8] sm:$0xff]
        %v286 = vld [vmem:[#allocation9] sm:$0xff]
        %v287 = vld [vmem:[#allocation9 + $0x8] sm:$0xff]
        %v288 = vld [vmem:[#allocation9 + $0x10] sm:$0xff]
        %v289 = vld [vmem:[#allocation9 + $0x18] sm:$0xff]
        %v290 = vld [vmem:[#allocation9 + $0x20] sm:$0xff]
        %v291 = vld [vmem:[#allocation9 + $0x28] sm:$0xff]
        %v292 = vld [vmem:[#allocation9 + $0x30] sm:$0xff]
        %v293 = vld [vmem:[#allocation9 + $0x38] sm:$0xff]
        %v294 = vld [vmem:[#allocation9 + $0x40] sm:$0xff]
        %v295 = vld [vmem:[#allocation9 + $0x48] sm:$0xff]
        %v296 = vld [vmem:[#allocation9 + $0x50] sm:$0xff]
        %v297 = vld [vmem:[#allocation9 + $0x58] sm:$0xff]
        %v298 = vld [vmem:[#allocation9 + $0x60] sm:$0xff]
        %v299 = vld [vmem:[#allocation9 + $0x68] sm:$0xff]
        %v300 = vld [vmem:[#allocation9 + $0x70] sm:$0xff]
        %v301 = vld [vmem:[#allocation9 + $0x78] sm:$0xff]
        %v302 = vld [vmem:[%s238] sm:$0xff]
        %v303 = vld [vmem:[%s238 + $0x8] sm:$0xff]
        %v304 = vld [vmem:[%s247] sm:$0xff]
        %v305 = vld [vmem:[%s247 + $0x8] sm:$0xff]
        %v306 = vsub.f32 %v302, %v304
        %v307 = vsub.f32 %v303, %v305
        %308 = vmatprep.subr.mxu0 0.0
        %309 = vmatpush1.msra.mxu0 %v286
        %310 = vmatprep.subr.mxu0 0.0
        %311 = vmatpush1.msra.mxu0 %v287
        %312 = vmatprep.subr.mxu0 0.0
        %313 = vmatpush1.msra.mxu0 %v288
        %314 = vmatprep.subr.mxu0 0.0
        %315 = vmatpush1.msra.mxu0 %v289
        %316 = vmatprep.subr.mxu0 0.0
        %317 = vmatpush1.msra.mxu0 %v290
        %318 = vmatprep.subr.mxu0 0.0
        %319 = vmatpush1.msra.mxu0 %v291
        %320 = vmatprep.subr.mxu0 0.0
        %321 = vmatpush1.msra.mxu0 %v292
        %322 = vmatprep.subr.mxu0 0.0
        %323 = vmatpush1.msra.mxu0 %v293
        %324 = vmatprep.subr.mxu0 0.0
        %325 = vmatpush1.msra.mxu0 %v294
        %326 = vmatprep.subr.mxu0 0.0
        %327 = vmatpush1.msra.mxu0 %v295
        %328 = vmatprep.subr.mxu0 0.0
        %329 = vmatpush1.msra.mxu0 %v296
        %330 = vmatprep.subr.mxu0 0.0
        %331 = vmatpush1.msra.mxu0 %v297
        %332 = vmatprep.subr.mxu0 0.0
        %333 = vmatpush1.msra.mxu0 %v298
        %334 = vmatprep.subr.mxu0 0.0
        %335 = vmatpush1.msra.mxu0 %v299
        %336 = vmatprep.subr.mxu0 0.0
        %337 = vmatpush1.msra.mxu0 %v300
        %338 = vmatprep.subr.mxu0 0.0
        %339 = vmatpush1.msra.mxu0 %v301
        %340 = vmatprep.subr.mxu0 0.0
        %341 = vmatpush1.msra.mxu0 0.0
        %342 = vmatprep.subr.mxu0 0.0
        %343 = vmatpush1.msra.mxu0 0.0
        %344 = vmatprep.subr.mxu0 0.0
        %345 = vmatpush1.msra.mxu0 0.0
        %346 = vmatprep.subr.mxu0 0.0
        %347 = vmatpush1.msra.mxu0 0.0
        %348 = vmatprep.subr.mxu0 0.0
        %349 = vmatpush1.msra.mxu0 0.0
        %350 = vmatprep.subr.mxu0 0.0
        %351 = vmatpush1.msra.mxu0 0.0
        %352 = vmatprep.subr.mxu0 0.0
        %353 = vmatpush1.msra.mxu0 0.0
        %354 = vmatprep.subr.mxu0 0.0
        %355 = vmatpush1.msra.mxu0 0.0
        %356 = vmatprep.subr.mxu0 0.0
        %357 = vmatpush1.msra.mxu0 0.0
        %358 = vmatprep.subr.mxu0 0.0
        %359 = vmatpush1.msra.mxu0 0.0
        %360 = vmatprep.subr.mxu0 0.0
        %361 = vmatpush1.msra.mxu0 0.0
        %362 = vmatprep.subr.mxu0 0.0
        %363 = vmatpush1.msra.mxu0 0.0
        %364 = vmatprep.subr.mxu0 0.0
        %365 = vmatpush1.msra.mxu0 0.0
        %366 = vmatprep.subr.mxu0 0.0
        %367 = vmatpush1.msra.mxu0 0.0
        %368 = vmatprep.subr.mxu0 0.0
        %369 = vmatpush1.msra.mxu0 0.0
        %370 = vmatprep.subr.mxu0 0.0
        %371 = vmatpush1.msra.mxu0 0.0
        %372 = vmatprep.mubr.f32.mxu0 0.0
        %373 = vmatmul.mubr.f32.gmra.mrb[0].mxu0 %v306
        %v374 = vpop.f32.mrb[0].mxu0
        %v375 = vadd.f32 0.0, %v374
        %v376 = vpop.f32.mrb[0].mxu0
        %377 = vmatprep.mubr.f32.mxu0 0.0
        %378 = vmatmul.mubr.f32.gmra.mrb[0].mxu0 %v307
        %v379 = vpop.f32.mrb[0].mxu0
        %v380 = vadd.f32 0.0, %v379
        %v381 = vpop.f32.mrb[0].mxu0
        %382 = vdwg.mxu0
        %383 = vst [vmem:[#allocation2] sm:$0xff] %v375
        %384 = vst [vmem:[#allocation2 + $0x8] sm:$0xff] %v380
        %v385 = vld [vmem:[#allocation2] sm:$0xff]
        %v386 = vld [vmem:[#allocation2 + $0x8] sm:$0xff]
        %vm387 = vcmask 130048
        %v389 = vsel %vm387, %v284, 0
        %v392 = vsel %vm387, %v285, 0
        %394 = vmatprep.subr.mxu0 0.0
        %395 = vmatpush1.msra.mxu0 %v385
        %396 = vmatprep.subr.mxu0 0.0
        %397 = vmatpush1.msra.mxu0 %v386
        %398 = vmatprep.subr.mxu0 0.0
        %399 = vmatpush1.msra.mxu0 0.0
        %400 = vmatprep.subr.mxu0 0.0
        %401 = vmatpush1.msra.mxu0 0.0
        %402 = vmatprep.subr.mxu0 0.0
        %403 = vmatpush1.msra.mxu0 0.0
        %404 = vmatprep.subr.mxu0 0.0
        %405 = vmatpush1.msra.mxu0 0.0
        %406 = vmatprep.subr.mxu0 0.0
        %407 = vmatpush1.msra.mxu0 0.0
        %408 = vmatprep.subr.mxu0 0.0
        %409 = vmatpush1.msra.mxu0 0.0
        %410 = vmatprep.subr.mxu0 0.0
        %411 = vmatpush1.msra.mxu0 0.0
        %412 = vmatprep.subr.mxu0 0.0
        %413 = vmatpush1.msra.mxu0 0.0
        %414 = vmatprep.subr.mxu0 0.0
        %415 = vmatpush1.msra.mxu0 0.0
        %416 = vmatprep.subr.mxu0 0.0
        %417 = vmatpush1.msra.mxu0 0.0
        %418 = vmatprep.subr.mxu0 0.0
        %419 = vmatpush1.msra.mxu0 0.0
        %420 = vmatprep.subr.mxu0 0.0
        %421 = vmatpush1.msra.mxu0 0.0
        %422 = vmatprep.subr.mxu0 0.0
        %423 = vmatpush1.msra.mxu0 0.0
        %424 = vmatprep.subr.mxu0 0.0
        %425 = vmatpush1.msra.mxu0 0.0
        %426 = vmatprep.subr.mxu0 0.0
        %427 = vmatpush1.msra.mxu0 0.0
        %428 = vmatprep.subr.mxu0 0.0
        %429 = vmatpush1.msra.mxu0 0.0
        %430 = vmatprep.subr.mxu0 0.0
        %431 = vmatpush1.msra.mxu0 0.0
        %432 = vmatprep.subr.mxu0 0.0
        %433 = vmatpush1.msra.mxu0 0.0
        %434 = vmatprep.subr.mxu0 0.0
        %435 = vmatpush1.msra.mxu0 0.0
        %436 = vmatprep.subr.mxu0 0.0
        %437 = vmatpush1.msra.mxu0 0.0
        %438 = vmatprep.subr.mxu0 0.0
        %439 = vmatpush1.msra.mxu0 0.0
        %440 = vmatprep.subr.mxu0 0.0
        %441 = vmatpush1.msra.mxu0 0.0
        %442 = vmatprep.subr.mxu0 0.0
        %443 = vmatpush1.msra.mxu0 0.0
        %444 = vmatprep.subr.mxu0 0.0
        %445 = vmatpush1.msra.mxu0 0.0
        %446 = vmatprep.subr.mxu0 0.0
        %447 = vmatpush1.msra.mxu0 0.0
        %448 = vmatprep.subr.mxu0 0.0
        %449 = vmatpush1.msra.mxu0 0.0
        %450 = vmatprep.subr.mxu0 0.0
        %451 = vmatpush1.msra.mxu0 0.0
        %452 = vmatprep.subr.mxu0 0.0
        %453 = vmatpush1.msra.mxu0 0.0
        %454 = vmatprep.subr.mxu0 0.0
        %455 = vmatpush1.msra.mxu0 0.0
        %456 = vmatprep.subr.mxu0 0.0
        %457 = vmatpush1.msra.mxu0 0.0
        %458 = vmatprep.mubr.f32.mxu0 0.0
        %459 = vmatmul.mubr.f32.gmra.mrb[0].mxu0 %v389
        %v460 = vpop.f32.mrb[0].mxu0
        %v461 = vadd.f32 0.0, %v460
        %v462 = vpop.f32.mrb[0].mxu0
        %463 = vmatprep.mubr.f32.mxu0 0.0
        %464 = vmatmul.mubr.f32.gmra.mrb[0].mxu0 %v392
        %v465 = vpop.f32.mrb[0].mxu0
        %v466 = vadd.f32 0.0, %v465
        %v467 = vpop.f32.mrb[0].mxu0
        %468 = vdwg.mxu0
        %v469 = vld [vmem:[%s238] sm:$0xff]
        %v470 = vld [vmem:[%s238 + $0x8] sm:$0xff]
        %v471 = vld [vmem:[%s247] sm:$0xff]
        %v472 = vld [vmem:[%s247 + $0x8] sm:$0xff]
        %v473 = vsub.f32 %v469, %v471
        %v474 = vsub.f32 %v470, %v472
        %v475 = vsub.f32 %v473, %v461
        %v476 = vsub.f32 %v474, %v466
        %v477 = vmul.f32 %v475, %v475
        %v478 = vmul.f32 %v476, %v476
        %v479 = vadd.f32 %v477, 1e-06
        %v480 = vadd.f32 %v478, 1e-06
        %v481 = vrsqrt.pop %v479
        %v482 = vmul.f32 %v479, %v481
        %vm483 = vcmp.eq.f32.partialorder %v479, inf
        %v484 = vsel %vm483, %v479, %v482
        %vm485 = vcmp.eq.f32.partialorder %v479, 0.0
        %v486 = vand.u32 %v479, 2147483648
        %v487 = vsel %vm485, %v486, %v484
        %v488 = vrsqrt.pop %v480
        %v489 = vmul.f32 %v480, %v488
        %vm490 = vcmp.eq.f32.partialorder %v480, inf
        %v491 = vsel %vm490, %v480, %v489
        %vm492 = vcmp.eq.f32.partialorder %v480, 0.0
        %v493 = vand.u32 %v480, 2147483648
        %v494 = vsel %vm492, %v493, %v491
        %v495 = vadd.f32 %v487, %v494
        %v496 = vrot.slane %v495, 4
        %v497 = vadd.f32 %v495, %v496
        %v498 = vrot.slane %v497, 2
        %v499 = vadd.f32 %v497, %v498
        %v500 = vrot.slane %v499, 1
        %v501 = vadd.f32 %v499, %v500
        %v502 = vadd.f32 %v501, 0.0
        %503 = vst [vmem:[%s283] sm:$0x1] %v502
        %s504 = sand.u32 %s127, 1
        %s505 = scalar_lea.sflag [#allocation5], %s504
        %s506 = sand.u32 %s127, 1
        %s507 = scalar_lea.vmem [#allocation11], %s506
        // Predicated region
        $region53: #{tpu_custom_call.1} parent=35 // pred_check
          %p508 = pneg %p137
        $region54: #{tpu_custom_call.1} parent=35 // pred_check_branch
          %510 = sbr.rel (%p508) target = $region56
        $region55: #{tpu_custom_call.1} parent=35 // pred_region
          %s512 = ssub.s32 16, 16
          %513 = vsyncadd %s505, %s512
          %s514 = smul.addr %s25, 16
          %s515 = scalar_lea.hbm %s4, %s514
          %s517 = sshll.u32 %s507, 4
          %s518 = int_to_ptr.vmem [resolvable:$true] %s517
          %520 = dma.vmem_to_hbm [thread:$0]  %s518, 16, %s515, %s505
        $region56: #{tpu_custom_call.1} parent=35 // pred_fallthru
          _
      $region36: #{tpu_custom_call.1} parent=5 // pred_fallthru
        _
      %p521 = scmp.le.s32.totalorder 2, %s20
      // Predicated region
      $region57: #{tpu_custom_call.1} parent=5 // pred_check
        %p522 = pneg %p521
      $region58: #{tpu_custom_call.1} parent=5 // pred_check_branch
        %524 = sbr.rel (%p522) target = $region60
      $region59: #{tpu_custom_call.1} parent=5 // pred_region
        %s525 = ssub.s32 %s20, 2
        // Predicated region
        $region61: #{tpu_custom_call.1} parent=59 // pred_check
          %p526 = pneg %p143
        $region62: #{tpu_custom_call.1} parent=59 // pred_check_branch
          %528 = sbr.rel (%p526) target = $region64
        $region63: #{tpu_custom_call.1} parent=59 // pred_region
          %s529 = sand.u32 %s128, 1
          %s530 = scalar_lea.sflag [#allocation5], %s529
          %s531 = sand.u32 %s128, 1
          %s532 = scalar_lea.vmem [#allocation11], %s531
          %533 = dma.done %s530, 16
        $region64: #{tpu_custom_call.1} parent=59 // pred_fallthru
          _
      $region60: #{tpu_custom_call.1} parent=5 // pred_fallthru
        _
    $region6: #{tpu_custom_call.1} parent=1 // loop_footer
      %s24 = sadd.s32 1, %s20
    $region7: #{tpu_custom_call.1} parent=1 // loop_footer_branch
      %19 = sbr.rel target = $region3
    $region8: #{tpu_custom_call.1} parent=1 // loop_exit
      _
    %534 = vsyncpa [#allocation4], 1
    %s535 = scalar_lea.sflag [#allocation4], 1
    %536 = vsyncpa %s535, 1
    %537 = vsyncpa [#allocation7], 1
    %s538 = scalar_lea.sflag [#allocation7], 1
    %539 = vsyncpa %s538, 1
    %540 = vsyncpa [#allocation10], 1
    %541 = vsyncpa [#allocation5], 1
    %s542 = scalar_lea.sflag [#allocation5], 1
    %543 = vsyncpa %s542, 1

// kernel: tpu_custom_call.1
$region0: #{tpu_custom_call.1}
  #allocation0 [shape = 'u32[]', space=smem, size = 0x4, offset = 0x4, fixed_abs, tag = 'smem constant byte address 0x4 - core index']
  #allocation1 [shape = 'u32[144,128]{1,0:T(1,128)}', space=vmem, size = 0x12000, scoped, tag = 'internal scratch']
  #allocation2 [shape = 'f32[1,16,128]{2,1,0:T(8,128)}', space=vmem, size = 0x2000, scoped, tag = 'scratch operand']
  %s0 = inlined_call_operand.hbm [shape: f32[2,16,128], index: 0, kind: input, shape index: {}]
  %s1 = inlined_call_operand.hbm [shape: f32[2,16,128], index: 1, kind: input, shape index: {}]
  %s2 = inlined_call_operand.hbm [shape: f32[16,16], index: 2, kind: input, shape index: {}]
  %s3 = inlined_call_operand.hbm [shape: f32[128,128], index: 3, kind: input, shape index: {}]
  %s4 = inlined_call_operand.hbm [shape: f32[2,1,128], index: 4, kind: output, shape index: {}]
  %s5 = sld [smem:[#allocation0]]
  $region65: #{tpu_custom_call.1} parent=0
    _
  %s7 = ssub.s32 1, %s5
  %s8 = scalar_select 0, %s7, %s5
  $region1: #{tpu_custom_call.1} parent=0
    #allocation3 [shape = 'u8[16384]{0}', space=vmem, size = 0x4000, scoped, tag = 'input window, operand 0']
    #allocation4 [shape = 's32[2]{0}', space=sflag, size = 0x8, scoped, tag = 'scoped memory for tpu_custom_call.1']
    #allocation5 [shape = 's32[2]{0}', space=sflag, size = 0x8, scoped, tag = 'scoped memory for tpu_custom_call.1']
    #allocation6 [shape = 'u8[16384]{0}', space=vmem, size = 0x4000, scoped, tag = 'input window, operand 1']
    #allocation7 [shape = 's32[2]{0}', space=sflag, size = 0x8, scoped, tag = 'scoped memory for tpu_custom_call.1']
    #allocation8 [shape = 'u8[8192]{0}', space=vmem, size = 0x2000, scoped, tag = 'input window, operand 2, single buffered']
    #allocation9 [shape = 'u8[65536]{0}', space=vmem, size = 0x10000, scoped, tag = 'input window, operand 3, single buffered']
    #allocation10 [shape = 's32[1]{0}', space=sflag, size = 0x4, scoped, tag = 'scoped memory for tpu_custom_call.1']
    #allocation11 [shape = 'u8[1024]{0}', space=vmem, size = 0x400, scoped, tag = 'output window, operand 0']
    %9 = vsyncpa [#allocation4], 0
    %s10 = scalar_lea.sflag [#allocation4], 1
    %11 = vsyncpa %s10, 0
    %12 = vsyncpa [#allocation7], 0
    %s13 = scalar_lea.sflag [#allocation7], 1
    %14 = vsyncpa %s13, 0
    %15 = vsyncpa [#allocation10], 0
    %16 = vsyncpa [#allocation5], 0
    %s17 = scalar_lea.sflag [#allocation5], 1
    %18 = vsyncpa %s17, 0
    loop: start=0, step=1, limit=4
    $region2: #{tpu_custom_call.1} parent=1 // loop_pre_header
      _
    $region3: #{tpu_custom_call.1} parent=1 // loop_header
      %s20 = sphi 0, %s24
      %p21 = scmp.ge.s32.totalorder %s20, 4
      %s30 = sphi 0, %s32
      %s33 = sphi 0, %s30
      %s34 = sphi 0, %s33
      %s50 = sphi 0, %s34
      %s56 = sphi 0, %s58
      %s59 = sphi 0, %s56
      %s60 = sphi 0, %s59
      %s76 = sphi 0, %s60
      %s80 = sphi 0, %s80
      %s82 = sphi 0, %s80
      %s83 = sphi 0, %s82
      %s97 = sphi 0, %s83
      %s101 = sphi 0, %s101
      %s103 = sphi 0, %s101
      %s104 = sphi 0, %s103
      %s118 = sphi 0, %s104
      %s124 = sphi 0, %s126
      %s127 = sphi 0, %s124
      %s128 = sphi 0, %s127
      %s144 = sphi 0, %s128
    $region4: #{tpu_custom_call.1} parent=1 // loop_header_branch
      %23 = sbr.rel (%p21) target = $region8
    $region5: #{tpu_custom_call.1} parent=1 // loop_body
      %s25 = ssub.s32 %s20, 1
      %s26 = ssub.s32 %s20, 2
      %s27 = sadd.s32 %s20, 1
      %s28 = ssub.s32 %s20, %s27
      %p29 = scmp.eq.s32.totalorder %s28, 0
      %s31 = sadd.s32 %s30, 1
      %s32 = scalar_select %p29, %s30, %s31
      %p35 = pneg %p29
      %p36 = scmp.eq.s32.totalorder %s20, 1
      %p37 = por %p35, %p36
      %p38 = scmp.ne.s32.totalorder %s30, %s33
      %p39 = scmp.eq.s32.totalorder %s20, 0
      %p40 = por %p38, %p39
      %p41 = scmp.ne.s32.totalorder %s30, %s33
      %p42 = scmp.eq.s32.totalorder %s25, 1
      %p43 = por %p41, %p42
      %p44 = scmp.ne.s32.totalorder %s33, %s34
      %p45 = scmp.eq.s32.totalorder %s25, 0
      %p46 = por %p44, %p45
      %p47 = scmp.ne.s32.totalorder %s33, %s34
      %p48 = scmp.eq.s32.totalorder %s26, 1
      %p49 = por %p47, %p48
      %p51 = scmp.ne.s32.totalorder %s34, %s50
      %p52 = scmp.eq.s32.totalorder %s26, 0
      %p53 = por %p51, %p52
      %s54 = ssub.s32 %s20, %s27
      %p55 = scmp.eq.s32.totalorder %s54, 0
      %s57 = sadd.s32 %s56, 1
      %s58 = scalar_select %p55, %s56, %s57
      %p61 = pneg %p55
      %p62 = scmp.eq.s32.totalorder %s20, 1
      %p63 = por %p61, %p62
      %p64 = scmp.ne.s32.totalorder %s56, %s59
      %p65 = scmp.eq.s32.totalorder %s20, 0
      %p66 = por %p64, %p65
      %p67 = scmp.ne.s32.totalorder %s56, %s59
      %p68 = scmp.eq.s32.totalorder %s25, 1
      %p69 = por %p67, %p68
      %p70 = scmp.ne.s32.totalorder %s59, %s60
      %p71 = scmp.eq.s32.totalorder %s25, 0
      %p72 = por %p70, %p71
      %p73 = scmp.ne.s32.totalorder %s59, %s60
      %p74 = scmp.eq.s32.totalorder %s26, 1
      %p75 = por %p73, %p74
      %p77 = scmp.ne.s32.totalorder %s60, %s76
      %p78 = scmp.eq.s32.totalorder %s26, 0
      %p79 = por %p77, %p78
      %s81 = sadd.s32 %s80, 1
      %p84 = scmp.eq.s32.totalorder %s20, 1
      %p85 = scmp.ne.s32.totalorder %s80, %s82
      %p86 = scmp.eq.s32.totalorder %s20, 0
      %p87 = por %p85, %p86
      %p88 = scmp.ne.s32.totalorder %s80, %s82
      %p89 = scmp.eq.s32.totalorder %s25, 1
      %p90 = por %p88, %p89
      %p91 = scmp.ne.s32.totalorder %s82, %s83
      %p92 = scmp.eq.s32.totalorder %s25, 0
      %p93 = por %p91, %p92
      %p94 = scmp.ne.s32.totalorder %s82, %s83
      %p95 = scmp.eq.s32.totalorder %s26, 1
      %p96 = por %p94, %p95
      %p98 = scmp.ne.s32.totalorder %s83, %s97
      %p99 = scmp.eq.s32.totalorder %s26, 0
      %p100 = por %p98, %p99
      %s102 = sadd.s32 %s101, 1
      %p105 = scmp.eq.s32.totalorder %s20, 1
      %p106 = scmp.ne.s32.totalorder %s101, %s103
      %p107 = scmp.eq.s32.totalorder %s20, 0
      %p108 = por %p106, %p107
      %p109 = scmp.ne.s32.totalorder %s101, %s103
      %p110 = scmp.eq.s32.totalorder %s25, 1
      %p111 = por %p109, %p110
      %p112 = scmp.ne.s32.totalorder %s103, %s104
      %p113 = scmp.eq.s32.totalorder %s25, 0
      %p114 = por %p112, %p113
      %p115 = scmp.ne.s32.totalorder %s103, %s104
      %p116 = scmp.eq.s32.totalorder %s26, 1
      %p117 = por %p115, %p116
      %p119 = scmp.ne.s32.totalorder %s104, %s118
      %p120 = scmp.eq.s32.totalorder %s26, 0
      %p121 = por %p119, %p120
      %s122 = ssub.s32 %s20, %s27
      %p123 = scmp.eq.s32.totalorder %s122, 0
      %s125 = sadd.s32 %s124, 1
      %s126 = scalar_select %p123, %s124, %s125
      %p129 = pneg %p123
      %p130 = scmp.eq.s32.totalorder %s20, 1
      %p131 = por %p129, %p130
      %p132 = scmp.ne.s32.totalorder %s124, %s127
      %p133 = scmp.eq.s32.totalorder %s20, 0
      %p134 = por %p132, %p133
      %p135 = scmp.ne.s32.totalorder %s124, %s127
      %p136 = scmp.eq.s32.totalorder %s25, 1
      %p137 = por %p135, %p136
      %p138 = scmp.ne.s32.totalorder %s127, %s128
      %p139 = scmp.eq.s32.totalorder %s25, 0
      %p140 = por %p138, %p139
      %p141 = scmp.ne.s32.totalorder %s127, %s128
      %p142 = scmp.eq.s32.totalorder %s26, 1
      %p143 = por %p141, %p142
      %p145 = scmp.ne.s32.totalorder %s128, %s144
      %p146 = scmp.eq.s32.totalorder %s26, 0
      %p147 = por %p145, %p146
      %p148 = scmp.le.s32.totalorder 1, %s20
      %p149 = scmp.lt.s32.totalorder %s20, 3
      %p150 = pnand %p148, %p149
      %p151 = pneg %p150
      // Predicated region
      $region9: #{tpu_custom_call.1} parent=5 // pred_check
        _
      $region10: #{tpu_custom_call.1} parent=5 // pred_check_branch
        %153 = sbr.rel (%p150) target = $region12
      $region11: #{tpu_custom_call.1} parent=5 // pred_region
        %s154 = ssub.s32 %s20, 1
        // Predicated region
        $region13: #{tpu_custom_call.1} parent=11 // pred_check
          %p155 = pneg %p93
        $region14: #{tpu_custom_call.1} parent=11 // pred_check_branch
          %157 = sbr.rel (%p155) target = $region16
        $region15: #{tpu_custom_call.1} parent=11 // pred_region
          %s159 = ssub.s32 256, 256
          %160 = vsyncadd [#allocation7], %s159
          %s161 = sshll.u32 [#allocation8], 4
          %s162 = int_to_ptr.vmem [resolvable:$true] %s161
          %167 = dma.hbm_to_vmem [thread:$0]  %s2, 256, %s162, [#allocation7], 128, 128, 8
        $region16: #{tpu_custom_call.1} parent=11 // pred_fallthru
          _
        // Predicated region
        $region17: #{tpu_custom_call.1} parent=11 // pred_check
          %p168 = pneg %p114
        $region18: #{tpu_custom_call.1} parent=11 // pred_check_branch
          %170 = sbr.rel (%p168) target = $region20
        $region19: #{tpu_custom_call.1} parent=11 // pred_region
          %s172 = ssub.s32 2048, 2048
          %173 = vsyncadd [#allocation10], %s172
          %s174 = sshll.u32 [#allocation9], 4
          %s175 = int_to_ptr.vmem [resolvable:$true] %s174
          %180 = dma.hbm_to_vmem [thread:$0]  %s3, 2048, %s175, [#allocation10], 128, 128, 8
        $region20: #{tpu_custom_call.1} parent=11 // pred_fallthru
          _
      $region12: #{tpu_custom_call.1} parent=5 // pred_fallthru
        _
      %p181 = scmp.lt.s32.totalorder %s20, 2
      // Predicated region
      $region21: #{tpu_custom_call.1} parent=5 // pred_check
        %p182 = pneg %p181
      $region22: #{tpu_custom_call.1} parent=5 // pred_check_branch
        %184 = sbr.rel (%p182) target = $region24
      $region23: #{tpu_custom_call.1} parent=5 // pred_region
        // Predicated region
        $region25: #{tpu_custom_call.1} parent=23 // pred_check
          %p185 = pneg %p40
        $region26: #{tpu_custom_call.1} parent=23 // pred_check_branch
          %187 = sbr.rel (%p185) target = $region28
        $region27: #{tpu_custom_call.1} parent=23 // pred_region
          %s188 = sand.u32 %s30, 1
          %s189 = scalar_lea.sflag [#allocation4], %s188
          %s190 = sand.u32 %s30, 1
          %s191 = smul.addr %s190, 16
          %s192 = scalar_lea.vmem [#allocation3], %s191
          %s194 = ssub.s32 256, 256
          %195 = vsyncadd %s189, %s194
          %s196 = smul.addr %s20, 2
          %s197 = smul.addr %s196, 128
          %s198 = scalar_lea.hbm %s0, %s197
          %s199 = sshll.u32 %s192, 4
          %s200 = int_to_ptr.vmem [resolvable:$true] %s199
          %205 = dma.hbm_to_vmem [thread:$0]  %s198, 256, %s200, %s189, 128, 128, 8
        $region28: #{tpu_custom_call.1} parent=23 // pred_fallthru
          _
        // Predicated region
        $region29: #{tpu_custom_call.1} parent=23 // pred_check
          %p206 = pneg %p66
        $region30: #{tpu_custom_call.1} parent=23 // pred_check_branch
          %208 = sbr.rel (%p206) target = $region32
        $region31: #{tpu_custom_call.1} parent=23 // pred_region
          %s209 = sand.u32 %s20, 1
          %s210 = scalar_lea.sflag [#allocation7], %s209
          %s211 = sand.u32 %s56, 1
          %s212 = smul.addr %s211, 16
          %s213 = scalar_lea.vmem [#allocation6], %s212
          %s215 = ssub.s32 256, 256
          %216 = vsyncadd %s210, %s215
          %s217 = smul.addr %s20, 2
          %s218 = smul.addr %s217, 128
          %s219 = scalar_lea.hbm %s1, %s218
          %s220 = sshll.u32 %s213, 4
          %s221 = int_to_ptr.vmem [resolvable:$true] %s220
          %226 = dma.hbm_to_vmem [thread:$0]  %s219, 256, %s221, %s210, 128, 128, 8
        $region32: #{tpu_custom_call.1} parent=23 // pred_fallthru
          _
      $region24: #{tpu_custom_call.1} parent=5 // pred_fallthru
        _
      %p227 = scmp.le.s32.totalorder 1, %s20
      %p228 = scmp.lt.s32.totalorder %s20, 3
      %p229 = pnand %p227, %p228
      %p230 = pneg %p229
      // Predicated region
      $region33: #{tpu_custom_call.1} parent=5 // pred_check
        _
      $region34: #{tpu_custom_call.1} parent=5 // pred_check_branch
        %232 = sbr.rel (%p229) target = $region36
      $region35: #{tpu_custom_call.1} parent=5 // pred_region
        %s233 = ssub.s32 %s20, 1
        %s234 = sand.u32 %s33, 1
        %s235 = scalar_lea.sflag [#allocation4], %s234
        %s236 = sand.u32 %s33, 1
        %s237 = smul.addr %s236, 16
        %s238 = scalar_lea.vmem [#allocation3], %s237
        // Predicated region
        $region37: #{tpu_custom_call.1} parent=35 // pred_check
          %p239 = pneg %p46
        $region38: #{tpu_custom_call.1} parent=35 // pred_check_branch
          %241 = sbr.rel (%p239) target = $region40
        $region39: #{tpu_custom_call.1} parent=35 // pred_region
          %242 = dma.done %s235, 256
        $region40: #{tpu_custom_call.1} parent=35 // pred_fallthru
          _
        %s243 = sand.u32 %s25, 1
        %s244 = scalar_lea.sflag [#allocation7], %s243
        %s245 = sand.u32 %s59, 1
        %s246 = smul.addr %s245, 16
        %s247 = scalar_lea.vmem [#allocation6], %s246
        // Predicated region
        $region41: #{tpu_custom_call.1} parent=35 // pred_check
          %p248 = pneg %p72
        $region42: #{tpu_custom_call.1} parent=35 // pred_check_branch
          %250 = sbr.rel (%p248) target = $region44
        $region43: #{tpu_custom_call.1} parent=35 // pred_region
          %251 = dma.done %s244, 256
        $region44: #{tpu_custom_call.1} parent=35 // pred_fallthru
          _
        // Predicated region
        $region45: #{tpu_custom_call.1} parent=35 // pred_check
          %p252 = pneg %p93
        $region46: #{tpu_custom_call.1} parent=35 // pred_check_branch
          %254 = sbr.rel (%p252) target = $region48
        $region47: #{tpu_custom_call.1} parent=35 // pred_region
          %255 = dma.done [#allocation7], 256
        $region48: #{tpu_custom_call.1} parent=35 // pred_fallthru
          _
        // Predicated region
        $region49: #{tpu_custom_call.1} parent=35 // pred_check
          %p256 = pneg %p114
        $region50: #{tpu_custom_call.1} parent=35 // pred_check_branch
          %258 = sbr.rel (%p256) target = $region52
        $region51: #{tpu_custom_call.1} parent=35 // pred_region
          %259 = dma.done [#allocation10], 2048
        $region52: #{tpu_custom_call.1} parent=35 // pred_fallthru
          _
        %s260 = sand.u32 %s33, 1
        %s261 = scalar_lea.sflag [#allocation4], %s260
        %s262 = sand.u32 %s33, 1
        %s263 = smul.addr %s262, 16
        %s264 = scalar_lea.vmem [#allocation3], %s263
        %p265 = pneg %p46
        %p266 = pneg %p43
        %s267 = sand.u32 %s25, 1
        %s268 = scalar_lea.sflag [#allocation7], %s267
        %s269 = sand.u32 %s59, 1
        %s270 = smul.addr %s269, 16
        %s271 = scalar_lea.vmem [#allocation6], %s270
        %p272 = pneg %p72
        %p273 = pneg %p69
        %p274 = pneg %p93
        %p275 = pneg %p90
        %p276 = pneg %p114
        %p277 = pneg %p111
        %p278 = pneg %p140
        %p279 = pneg %p137
        %s280 = sand.u32 %s127, 1
        %s281 = scalar_lea.sflag [#allocation5], %s280
        %s282 = sand.u32 %s127, 1
        %s283 = scalar_lea.vmem [#allocation11], %s282
        %v284 = vld [vmem:[#allocation8] sm:$0xff]
        %v285 = vld [vmem:[#allocation8 + $0x8] sm:$0xff]
        %v286 = vld [vmem:[#allocation9] sm:$0xff]
        %v287 = vld [vmem:[#allocation9 + $0x8] sm:$0xff]
        %v288 = vld [vmem:[#allocation9 + $0x10] sm:$0xff]
        %v289 = vld [vmem:[#allocation9 + $0x18] sm:$0xff]
        %v290 = vld [vmem:[#allocation9 + $0x20] sm:$0xff]
        %v291 = vld [vmem:[#allocation9 + $0x28] sm:$0xff]
        %v292 = vld [vmem:[#allocation9 + $0x30] sm:$0xff]
        %v293 = vld [vmem:[#allocation9 + $0x38] sm:$0xff]
        %v294 = vld [vmem:[#allocation9 + $0x40] sm:$0xff]
        %v295 = vld [vmem:[#allocation9 + $0x48] sm:$0xff]
        %v296 = vld [vmem:[#allocation9 + $0x50] sm:$0xff]
        %v297 = vld [vmem:[#allocation9 + $0x58] sm:$0xff]
        %v298 = vld [vmem:[#allocation9 + $0x60] sm:$0xff]
        %v299 = vld [vmem:[#allocation9 + $0x68] sm:$0xff]
        %v300 = vld [vmem:[#allocation9 + $0x70] sm:$0xff]
        %v301 = vld [vmem:[#allocation9 + $0x78] sm:$0xff]
        %v302 = vld [vmem:[%s238] sm:$0xff]
        %v303 = vld [vmem:[%s238 + $0x8] sm:$0xff]
        %v304 = vld [vmem:[%s247] sm:$0xff]
        %v305 = vld [vmem:[%s247 + $0x8] sm:$0xff]
        %v306 = vsub.f32 %v302, %v304
        %v307 = vsub.f32 %v303, %v305
        %308 = vmatprep.subr.mxu0 0.0
        %309 = vmatpush1.msra.mxu0 %v286
        %310 = vmatprep.subr.mxu0 0.0
        %311 = vmatpush1.msra.mxu0 %v287
        %312 = vmatprep.subr.mxu0 0.0
        %313 = vmatpush1.msra.mxu0 %v288
        %314 = vmatprep.subr.mxu0 0.0
        %315 = vmatpush1.msra.mxu0 %v289
        %316 = vmatprep.subr.mxu0 0.0
        %317 = vmatpush1.msra.mxu0 %v290
        %318 = vmatprep.subr.mxu0 0.0
        %319 = vmatpush1.msra.mxu0 %v291
        %320 = vmatprep.subr.mxu0 0.0
        %321 = vmatpush1.msra.mxu0 %v292
        %322 = vmatprep.subr.mxu0 0.0
        %323 = vmatpush1.msra.mxu0 %v293
        %324 = vmatprep.subr.mxu0 0.0
        %325 = vmatpush1.msra.mxu0 %v294
        %326 = vmatprep.subr.mxu0 0.0
        %327 = vmatpush1.msra.mxu0 %v295
        %328 = vmatprep.subr.mxu0 0.0
        %329 = vmatpush1.msra.mxu0 %v296
        %330 = vmatprep.subr.mxu0 0.0
        %331 = vmatpush1.msra.mxu0 %v297
        %332 = vmatprep.subr.mxu0 0.0
        %333 = vmatpush1.msra.mxu0 %v298
        %334 = vmatprep.subr.mxu0 0.0
        %335 = vmatpush1.msra.mxu0 %v299
        %336 = vmatprep.subr.mxu0 0.0
        %337 = vmatpush1.msra.mxu0 %v300
        %338 = vmatprep.subr.mxu0 0.0
        %339 = vmatpush1.msra.mxu0 %v301
        %340 = vmatprep.subr.mxu0 0.0
        %341 = vmatpush1.msra.mxu0 0.0
        %342 = vmatprep.subr.mxu0 0.0
        %343 = vmatpush1.msra.mxu0 0.0
        %344 = vmatprep.subr.mxu0 0.0
        %345 = vmatpush1.msra.mxu0 0.0
        %346 = vmatprep.subr.mxu0 0.0
        %347 = vmatpush1.msra.mxu0 0.0
        %348 = vmatprep.subr.mxu0 0.0
        %349 = vmatpush1.msra.mxu0 0.0
        %350 = vmatprep.subr.mxu0 0.0
        %351 = vmatpush1.msra.mxu0 0.0
        %352 = vmatprep.subr.mxu0 0.0
        %353 = vmatpush1.msra.mxu0 0.0
        %354 = vmatprep.subr.mxu0 0.0
        %355 = vmatpush1.msra.mxu0 0.0
        %356 = vmatprep.subr.mxu0 0.0
        %357 = vmatpush1.msra.mxu0 0.0
        %358 = vmatprep.subr.mxu0 0.0
        %359 = vmatpush1.msra.mxu0 0.0
        %360 = vmatprep.subr.mxu0 0.0
        %361 = vmatpush1.msra.mxu0 0.0
        %362 = vmatprep.subr.mxu0 0.0
        %363 = vmatpush1.msra.mxu0 0.0
        %364 = vmatprep.subr.mxu0 0.0
        %365 = vmatpush1.msra.mxu0 0.0
        %366 = vmatprep.subr.mxu0 0.0
        %367 = vmatpush1.msra.mxu0 0.0
        %368 = vmatprep.subr.mxu0 0.0
        %369 = vmatpush1.msra.mxu0 0.0
        %370 = vmatprep.subr.mxu0 0.0
        %371 = vmatpush1.msra.mxu0 0.0
        %372 = vmatprep.mubr.f32.mxu0 0.0
        %373 = vmatmul.mubr.f32.gmra.mrb[0].mxu0 %v306
        %v374 = vpop.f32.mrb[0].mxu0
        %v375 = vadd.f32 0.0, %v374
        %v376 = vpop.f32.mrb[0].mxu0
        %377 = vmatprep.mubr.f32.mxu0 0.0
        %378 = vmatmul.mubr.f32.gmra.mrb[0].mxu0 %v307
        %v379 = vpop.f32.mrb[0].mxu0
        %v380 = vadd.f32 0.0, %v379
        %v381 = vpop.f32.mrb[0].mxu0
        %382 = vdwg.mxu0
        %383 = vst [vmem:[#allocation2] sm:$0xff] %v375
        %384 = vst [vmem:[#allocation2 + $0x8] sm:$0xff] %v380
        %v385 = vld [vmem:[#allocation2] sm:$0xff]
        %v386 = vld [vmem:[#allocation2 + $0x8] sm:$0xff]
        %vm387 = vcmask 130048
        %v389 = vsel %vm387, %v284, 0
        %v392 = vsel %vm387, %v285, 0
        %394 = vmatprep.subr.mxu0 0.0
        %395 = vmatpush1.msra.mxu0 %v385
        %396 = vmatprep.subr.mxu0 0.0
        %397 = vmatpush1.msra.mxu0 %v386
        %398 = vmatprep.subr.mxu0 0.0
        %399 = vmatpush1.msra.mxu0 0.0
        %400 = vmatprep.subr.mxu0 0.0
        %401 = vmatpush1.msra.mxu0 0.0
        %402 = vmatprep.subr.mxu0 0.0
        %403 = vmatpush1.msra.mxu0 0.0
        %404 = vmatprep.subr.mxu0 0.0
        %405 = vmatpush1.msra.mxu0 0.0
        %406 = vmatprep.subr.mxu0 0.0
        %407 = vmatpush1.msra.mxu0 0.0
        %408 = vmatprep.subr.mxu0 0.0
        %409 = vmatpush1.msra.mxu0 0.0
        %410 = vmatprep.subr.mxu0 0.0
        %411 = vmatpush1.msra.mxu0 0.0
        %412 = vmatprep.subr.mxu0 0.0
        %413 = vmatpush1.msra.mxu0 0.0
        %414 = vmatprep.subr.mxu0 0.0
        %415 = vmatpush1.msra.mxu0 0.0
        %416 = vmatprep.subr.mxu0 0.0
        %417 = vmatpush1.msra.mxu0 0.0
        %418 = vmatprep.subr.mxu0 0.0
        %419 = vmatpush1.msra.mxu0 0.0
        %420 = vmatprep.subr.mxu0 0.0
        %421 = vmatpush1.msra.mxu0 0.0
        %422 = vmatprep.subr.mxu0 0.0
        %423 = vmatpush1.msra.mxu0 0.0
        %424 = vmatprep.subr.mxu0 0.0
        %425 = vmatpush1.msra.mxu0 0.0
        %426 = vmatprep.subr.mxu0 0.0
        %427 = vmatpush1.msra.mxu0 0.0
        %428 = vmatprep.subr.mxu0 0.0
        %429 = vmatpush1.msra.mxu0 0.0
        %430 = vmatprep.subr.mxu0 0.0
        %431 = vmatpush1.msra.mxu0 0.0
        %432 = vmatprep.subr.mxu0 0.0
        %433 = vmatpush1.msra.mxu0 0.0
        %434 = vmatprep.subr.mxu0 0.0
        %435 = vmatpush1.msra.mxu0 0.0
        %436 = vmatprep.subr.mxu0 0.0
        %437 = vmatpush1.msra.mxu0 0.0
        %438 = vmatprep.subr.mxu0 0.0
        %439 = vmatpush1.msra.mxu0 0.0
        %440 = vmatprep.subr.mxu0 0.0
        %441 = vmatpush1.msra.mxu0 0.0
        %442 = vmatprep.subr.mxu0 0.0
        %443 = vmatpush1.msra.mxu0 0.0
        %444 = vmatprep.subr.mxu0 0.0
        %445 = vmatpush1.msra.mxu0 0.0
        %446 = vmatprep.subr.mxu0 0.0
        %447 = vmatpush1.msra.mxu0 0.0
        %448 = vmatprep.subr.mxu0 0.0
        %449 = vmatpush1.msra.mxu0 0.0
        %450 = vmatprep.subr.mxu0 0.0
        %451 = vmatpush1.msra.mxu0 0.0
        %452 = vmatprep.subr.mxu0 0.0
        %453 = vmatpush1.msra.mxu0 0.0
        %454 = vmatprep.subr.mxu0 0.0
        %455 = vmatpush1.msra.mxu0 0.0
        %456 = vmatprep.subr.mxu0 0.0
        %457 = vmatpush1.msra.mxu0 0.0
        %458 = vmatprep.mubr.f32.mxu0 0.0
        %459 = vmatmul.mubr.f32.gmra.mrb[0].mxu0 %v389
        %v460 = vpop.f32.mrb[0].mxu0
        %v461 = vadd.f32 0.0, %v460
        %v462 = vpop.f32.mrb[0].mxu0
        %463 = vmatprep.mubr.f32.mxu0 0.0
        %464 = vmatmul.mubr.f32.gmra.mrb[0].mxu0 %v392
        %v465 = vpop.f32.mrb[0].mxu0
        %v466 = vadd.f32 0.0, %v465
        %v467 = vpop.f32.mrb[0].mxu0
        %468 = vdwg.mxu0
        %v469 = vld [vmem:[%s238] sm:$0xff]
        %v470 = vld [vmem:[%s238 + $0x8] sm:$0xff]
        %v471 = vld [vmem:[%s247] sm:$0xff]
        %v472 = vld [vmem:[%s247 + $0x8] sm:$0xff]
        %v473 = vsub.f32 %v469, %v471
        %v474 = vsub.f32 %v470, %v472
        %v475 = vsub.f32 %v473, %v461
        %v476 = vsub.f32 %v474, %v466
        %v477 = vmul.f32 %v475, %v475
        %v478 = vmul.f32 %v476, %v476
        %v479 = vadd.f32 %v477, 1e-06
        %v480 = vadd.f32 %v478, 1e-06
        %v481 = vrsqrt.pop %v479
        %v482 = vmul.f32 %v479, %v481
        %vm483 = vcmp.eq.f32.partialorder %v479, inf
        %v484 = vsel %vm483, %v479, %v482
        %vm485 = vcmp.eq.f32.partialorder %v479, 0.0
        %v486 = vand.u32 %v479, 2147483648
        %v487 = vsel %vm485, %v486, %v484
        %v488 = vrsqrt.pop %v480
        %v489 = vmul.f32 %v480, %v488
        %vm490 = vcmp.eq.f32.partialorder %v480, inf
        %v491 = vsel %vm490, %v480, %v489
        %vm492 = vcmp.eq.f32.partialorder %v480, 0.0
        %v493 = vand.u32 %v480, 2147483648
        %v494 = vsel %vm492, %v493, %v491
        %v495 = vadd.f32 %v487, %v494
        %v496 = vrot.slane %v495, 4
        %v497 = vadd.f32 %v495, %v496
        %v498 = vrot.slane %v497, 2
        %v499 = vadd.f32 %v497, %v498
        %v500 = vrot.slane %v499, 1
        %v501 = vadd.f32 %v499, %v500
        %v502 = vadd.f32 %v501, 0.0
        %503 = vst [vmem:[%s283] sm:$0x1] %v502
        %s504 = sand.u32 %s127, 1
        %s505 = scalar_lea.sflag [#allocation5], %s504
        %s506 = sand.u32 %s127, 1
        %s507 = scalar_lea.vmem [#allocation11], %s506
        // Predicated region
        $region53: #{tpu_custom_call.1} parent=35 // pred_check
          %p508 = pneg %p137
        $region54: #{tpu_custom_call.1} parent=35 // pred_check_branch
          %510 = sbr.rel (%p508) target = $region56
        $region55: #{tpu_custom_call.1} parent=35 // pred_region
          %s512 = ssub.s32 16, 16
          %513 = vsyncadd %s505, %s512
          %s514 = smul.addr %s25, 16
          %s515 = scalar_lea.hbm %s4, %s514
          %s517 = sshll.u32 %s507, 4
          %s518 = int_to_ptr.vmem [resolvable:$true] %s517
          %520 = dma.vmem_to_hbm [thread:$0]  %s518, 16, %s515, %s505
        $region56: #{tpu_custom_call.1} parent=35 // pred_fallthru
          _
      $region36: #{tpu_custom_call.1} parent=5 // pred_fallthru
        _
      %p521 = scmp.le.s32.totalorder 2, %s20
      // Predicated region
      $region57: #{tpu_custom_call.1} parent=5 // pred_check
        %p522 = pneg %p521
      $region58: #{tpu_custom_call.1} parent=5 // pred_check_branch
        %524 = sbr.rel (%p522) target = $region60
      $region59: #{tpu_custom_call.1} parent=5 // pred_region
        %s525 = ssub.s32 %s20, 2
        // Predicated region
        $region61: #{tpu_custom_call.1} parent=59 // pred_check
          %p526 = pneg %p143
        $region62: #{tpu_custom_call.1} parent=59 // pred_check_branch
          %528 = sbr.rel (%p526) target = $region64
        $region63: #{tpu_custom_call.1} parent=59 // pred_region
          %s529 = sand.u32 %s128, 1
          %s530 = scalar_lea.sflag [#allocation5], %s529
          %s531 = sand.u32 %s128, 1
          %s532 = scalar_lea.vmem [#allocation11], %s531
          %533 = dma.done %s530, 16
        $region64: #{tpu_custom_call.1} parent=59 // pred_fallthru
          _
      $region60: #{tpu_custom_call.1} parent=5 // pred_fallthru
        _
    $region6: #{tpu_custom_call.1} parent=1 // loop_footer
      %s24 = sadd.s32 1, %s20
    $region7: #{tpu_custom_call.1} parent=1 // loop_footer_branch
      %19 = sbr.rel target = $region3
    $region8: #{tpu_custom_call.1} parent=1 // loop_exit
      _
    %534 = vsyncpa [#allocation4], 1
    %s535 = scalar_lea.sflag [#allocation4], 1
    %536 = vsyncpa %s535, 1
    %537 = vsyncpa [#allocation7], 1
    %s538 = scalar_lea.sflag [#allocation7], 1
    %539 = vsyncpa %s538, 1
    %540 = vsyncpa [#allocation10], 1
    %541 = vsyncpa [#allocation5], 1
    %s542 = scalar_lea.sflag [#allocation5], 1
    %543 = vsyncpa %s542, 1

</llo_original>
